<compile_context>
chip_gen: v6e
topology: v6e:2x2x1
jax: 0.10.0
libtpu: 0.0.40
codegen_flags: <defaults>
</compile_context>

<pallas_src>
import functools

import jax
import jax.numpy as jnp
from jax import lax
from jax.experimental import pallas as pl
from jax.experimental.pallas import tpu as pltpu


def _build_toeplitz_weight(w_oihw, W, K, stride, padding):
    """Per-kh Toeplitz weight: (K, W*Cin, Wo*Cout).

    W_toep[kh, w*Cin+ci, wo*Cout+co] = w[co, ci, kh, w+padding-wo*stride]
    if that tap index is in [0, K), else 0.  Width zero-padding of the conv is
    therefore folded into the weight."""
    Cout, Cin, _, _ = w_oihw.shape
    Wo = (W + 2 * padding - K) // stride + 1
    w_hwio = jnp.transpose(w_oihw, (2, 3, 1, 0))            # (K, K, Cin, Cout)
    w_col = jnp.arange(W)[:, None]                          # unpadded input col
    wo_col = jnp.arange(Wo)[None, :]                        # output col
    kw = w_col + padding - wo_col * stride                  # (W, Wo)
    valid = (kw >= 0) & (kw < K)
    kw_c = jnp.clip(kw, 0, K - 1)
    blk = w_hwio[:, kw_c, :, :]                             # (K, W, Wo, Cin, Cout)
    blk = blk * valid[None, :, :, None, None].astype(blk.dtype)
    # (K, W, Cin, Wo, Cout) -> (K, W*Cin, Wo*Cout)
    return blk.transpose(0, 1, 3, 2, 4).reshape(K, W * Cin, Wo * Cout)


def _conv_relu_kernel(x_ref, wt_ref, b_ref, o_ref, xpad_ref, *, K, pad):
    """One batch element per grid step.

    x_ref:    (1, H,  W*Cin)        unpadded width-flattened input (VMEM)
    wt_ref:   (K, W*Cin, Wo*Cout)   per-kh Toeplitz weights (VMEM)
    b_ref:    (1, Wo*Cout)          width-tiled bias (VMEM)
    o_ref:    (1, Ho, Wo*Cout)      lane-dense output tile (VMEM)
    xpad_ref: (H+2*pad, W*Cin)      height-padded scratch (VMEM)
    """
    H = x_ref.shape[1]
    Ho = o_ref.shape[1]

    # In-kernel height zero-padding (width padding is baked into wt_ref).
    xpad_ref[...] = jnp.zeros_like(xpad_ref)
    xpad_ref[pad:pad + H, :] = x_ref[0]

    # One MXU contraction per kernel row: (Ho, W*Cin) @ (W*Cin, Wo*Cout).
    # Lane-dense f32 accumulator (Ho, Wo*Cout) = (16, 128) -> 2 vregs.
    acc = jnp.zeros(o_ref.shape[1:], jnp.float32)
    for kh in range(K):                                     # static unroll, K=3
        acc = acc + jnp.dot(xpad_ref[kh:kh + Ho, :], wt_ref[kh],
                            preferred_element_type=jnp.float32)

    acc = acc + b_ref[...]                                  # bias, broadcast over Ho
    acc = jnp.maximum(acc, 0.0)                             # ReLU; norm='none'
    o_ref[0] = acc.astype(o_ref.dtype)


def conv2d_block_forward(x_nchw, w_oihw, bias, *, stride=1, padding=1):
    """Pallas implementation of Conv2dBlock.forward (norm='none', act='relu',
    pad_type='zero').  Input/weight follow PyTorch conventions (NCHW / OIHW)."""
    N, Cin, H, W = x_nchw.shape
    Cout, Cin_w, K, K2 = w_oihw.shape
    assert Cin == Cin_w and K == K2
    assert stride == 1, "Toeplitz formulation assumes stride=1 (module config)"

    Ho = (H + 2 * padding - K) // stride + 1
    Wo = (W + 2 * padding - K) // stride + 1
    Hp = H + 2 * padding

    # Layout glue at the PyTorch NCHW boundary: one small transpose in, one
    # out; the (N,H,W,Cin)->(N,H,W*Cin) reshape is free (contiguous).
    x_flat = jnp.transpose(x_nchw, (0, 2, 3, 1)).reshape(N, H, W * Cin)

    # Tiny one-time weight/bias preprocessing (done in the wrapper).
    w_toep = _build_toeplitz_weight(w_oihw, W, K, stride, padding)
    b_tiled = jnp.tile(bias, Wo).reshape(1, Wo * Cout)

    kernel = functools.partial(_conv_relu_kernel, K=K, pad=padding)

    out_flat = pl.pallas_call(
        kernel,
        out_shape=jax.ShapeDtypeStruct((N, Ho, Wo * Cout), x_nchw.dtype),
        grid_spec=pltpu.PrefetchScalarGridSpec(
            num_scalar_prefetch=0,
            grid=(N,),
            in_specs=[
                pl.BlockSpec((1, H, W * Cin), lambda n: (n, 0, 0)),
                pl.BlockSpec((K, W * Cin, Wo * Cout), lambda n: (0, 0, 0)),
                pl.BlockSpec((1, Wo * Cout), lambda n: (0, 0)),
            ],
            out_specs=pl.BlockSpec((1, Ho, Wo * Cout), lambda n: (n, 0, 0)),
            scratch_shapes=[pltpu.VMEM((Hp, W * Cin), x_nchw.dtype)],
        ),
        compiler_params=pltpu.CompilerParams(
            dimension_semantics=("parallel",)),
    )(x_flat, w_toep, b_tiled)

    # Back to PyTorch NCHW convention.
    out_nhwc = out_flat.reshape(N, Ho, Wo, Cout)
    return jnp.transpose(out_nhwc, (0, 3, 1, 2))


def _reference(x_nchw, w_oihw, bias, *, stride=1, padding=1):
    out = lax.conv_general_dilated(
        x_nchw, w_oihw,
        window_strides=(stride, stride),
        padding=[(padding, padding), (padding, padding)],
        dimension_numbers=("NCHW", "OIHW", "NCHW"),
    )
    out = out + bias[None, :, None, None]
    return jnp.maximum(out, 0.0)


if __name__ == "__main__":
    key = jax.random.PRNGKey(0)
    kx, kw, kb = jax.random.split(key, 3)

    N, Cin, H, W = 2, 4, 16, 16
    Cout, K, stride, padding = 8, 3, 1, 1

    x = jax.random.normal(kx, (N, Cin, H, W), dtype=jnp.float32)
    # Deterministic parameter init (same shapes as nn.Conv2d(4, 8, 3, 1, bias=True)).
    fan_in = Cin * K * K
    bound = 1.0 / (fan_in ** 0.5)
    w = jax.random.uniform(kw, (Cout, Cin, K, K), jnp.float32, -bound, bound)
    b = jax.random.uniform(kb, (Cout,), jnp.float32, -bound, bound)

    out = conv2d_block_forward(x, w, b, stride=stride, padding=padding)
    out = jax.block_until_ready(out)

    ref = _reference(x, w, b, stride=stride, padding=padding)
    assert out.shape == (N, Cout, H, W)
    assert jnp.allclose(out, ref, atol=1e-4, rtol=1e-4), "mismatch vs reference"

    print("KERNEL_OK")
</pallas_src>

<mosaic_0001>
module attributes {stable_mosaic.version = 11 : i64} {
  func.func @_conv_relu_kernel(%arg0: i32, %arg1: memref<1x16x64xf32, #tpu.memory_space<vmem>>, %arg2: memref<3x64x128xf32, #tpu.memory_space<vmem>>, %arg3: memref<1x128xf32, #tpu.memory_space<vmem>>, %arg4: memref<1x16x128xf32, #tpu.memory_space<vmem>>, %arg5: memref<18x64xf32, #tpu.memory_space<vmem>>) attributes {dimension_semantics = [#tpu.dimension_semantics<parallel>], iteration_bounds = array<i64: 2>, scalar_prefetch = 0 : i64, scratch_operands = 1 : i64, tpu.core_type = #tpu.core_type<tc>, window_params = [{transform_indices = @transform_0, window_bounds = array<i64: 1, 16, 64>}, {pipeline_mode = #tpu.pipeline_mode<synchronous>, transform_indices = @transform_1, window_bounds = array<i64: 3, 64, 128>}, {pipeline_mode = #tpu.pipeline_mode<synchronous>, transform_indices = @transform_2, window_bounds = array<i64: 1, 128>}, {transform_indices = @transform_3, window_bounds = array<i64: 1, 16, 128>}]} {
    %cst = arith.constant 0.000000e+00 : f32
    %0 = vector.broadcast %cst : f32 to vector<18x64xf32>
    %c0 = arith.constant 0 : index
    %c0_0 = arith.constant 0 : index
    %1 = vector.load %arg5[%c0, %c0_0] : memref<18x64xf32, #tpu.memory_space<vmem>>, vector<18x64xf32>
    tpu.vector_store %arg5[%c0, %c0_0], %0 {strides = array<i32>} : memref<18x64xf32, #tpu.memory_space<vmem>>, vector<18x64xf32>,
    %c0_1 = arith.constant 0 : index
    %c0_2 = arith.constant 0 : index
    %c0_3 = arith.constant 0 : index
    %2 = vector.load %arg1[%c0_1, %c0_2, %c0_3] : memref<1x16x64xf32, #tpu.memory_space<vmem>>, vector<1x16x64xf32>
    %3 = vector.shape_cast %2 : vector<1x16x64xf32> to vector<16x64xf32>
    %c1 = arith.constant 1 : index
    %c0_4 = arith.constant 0 : index
    %4 = vector.load %arg5[%c1, %c0_4] : memref<18x64xf32, #tpu.memory_space<vmem>>, vector<16x64xf32>
    tpu.vector_store %arg5[%c1, %c0_4], %3 {strides = array<i32>} : memref<18x64xf32, #tpu.memory_space<vmem>>, vector<16x64xf32>,
    %cst_5 = arith.constant 0.000000e+00 : f32
    %5 = vector.broadcast %cst_5 : f32 to vector<16x128xf32>
    %c0_6 = arith.constant 0 : index
    %c0_7 = arith.constant 0 : index
    %6 = vector.load %arg5[%c0_6, %c0_7] : memref<18x64xf32, #tpu.memory_space<vmem>>, vector<16x64xf32>
    %c0_8 = arith.constant 0 : index
    %c0_9 = arith.constant 0 : index
    %c0_10 = arith.constant 0 : index
    %7 = vector.load %arg2[%c0_8, %c0_9, %c0_10] : memref<3x64x128xf32, #tpu.memory_space<vmem>>, vector<1x64x128xf32>
    %8 = vector.shape_cast %7 : vector<1x64x128xf32> to vector<64x128xf32>
    %cst_11 = arith.constant dense<0.000000e+00> : vector<16x128xf32>
    %9 = tpu.matmul %6, %8, %cst_11 {dimension_numbers = #tpu.dot_dimension_numbers<[1], [0], [0], [1], [0, 0, 1, 1], [], []>} : vector<16x64xf32>, vector<64x128xf32>, vector<16x128xf32> -> vector<16x128xf32>
    %10 = arith.addf %5, %9 : vector<16x128xf32>
    %c1_12 = arith.constant 1 : index
    %c0_13 = arith.constant 0 : index
    %11 = vector.load %arg5[%c1_12, %c0_13] : memref<18x64xf32, #tpu.memory_space<vmem>>, vector<16x64xf32>
    %c1_14 = arith.constant 1 : index
    %c0_15 = arith.constant 0 : index
    %c0_16 = arith.constant 0 : index
    %12 = vector.load %arg2[%c1_14, %c0_15, %c0_16] : memref<3x64x128xf32, #tpu.memory_space<vmem>>, vector<1x64x128xf32>
    %13 = vector.shape_cast %12 : vector<1x64x128xf32> to vector<64x128xf32>
    %cst_17 = arith.constant dense<0.000000e+00> : vector<16x128xf32>
    %14 = tpu.matmul %11, %13, %cst_17 {dimension_numbers = #tpu.dot_dimension_numbers<[1], [0], [0], [1], [0, 0, 1, 1], [], []>} : vector<16x64xf32>, vector<64x128xf32>, vector<16x128xf32> -> vector<16x128xf32>
    %15 = arith.addf %10, %14 : vector<16x128xf32>
    %c2 = arith.constant 2 : index
    %c0_18 = arith.constant 0 : index
    %16 = vector.load %arg5[%c2, %c0_18] : memref<18x64xf32, #tpu.memory_space<vmem>>, vector<16x64xf32>
    %c2_19 = arith.constant 2 : index
    %c0_20 = arith.constant 0 : index
    %c0_21 = arith.constant 0 : index
    %17 = vector.load %arg2[%c2_19, %c0_20, %c0_21] : memref<3x64x128xf32, #tpu.memory_space<vmem>>, vector<1x64x128xf32>
    %18 = vector.shape_cast %17 : vector<1x64x128xf32> to vector<64x128xf32>
    %cst_22 = arith.constant dense<0.000000e+00> : vector<16x128xf32>
    %19 = tpu.matmul %16, %18, %cst_22 {dimension_numbers = #tpu.dot_dimension_numbers<[1], [0], [0], [1], [0, 0, 1, 1], [], []>} : vector<16x64xf32>, vector<64x128xf32>, vector<16x128xf32> -> vector<16x128xf32>
    %20 = arith.addf %15, %19 : vector<16x128xf32>
    %c0_23 = arith.constant 0 : index
    %c0_24 = arith.constant 0 : index
    %21 = vector.load %arg3[%c0_23, %c0_24] : memref<1x128xf32, #tpu.memory_space<vmem>>, vector<1x128xf32>
    %22 = vector.broadcast %21 : vector<1x128xf32> to vector<16x128xf32>
    %23 = arith.addf %20, %22 : vector<16x128xf32>
    %cst_25 = arith.constant 0.000000e+00 : f32
    %24 = vector.broadcast %cst_25 : f32 to vector<16x128xf32>
    %25 = arith.maximumf %23, %24 : vector<16x128xf32>
    %c0_26 = arith.constant 0 : index
    %c0_27 = arith.constant 0 : index
    %c0_28 = arith.constant 0 : index
    %26 = vector.load %arg4[%c0_26, %c0_27, %c0_28] : memref<1x16x128xf32, #tpu.memory_space<vmem>>, vector<1x16x128xf32>
    %27 = vector.shape_cast %26 : vector<1x16x128xf32> to vector<16x128xf32>
    %28 = vector.shape_cast %25 : vector<16x128xf32> to vector<1x16x128xf32>
    tpu.vector_store %arg4[%c0_26, %c0_27, %c0_28], %28 {strides = array<i32>} : memref<1x16x128xf32, #tpu.memory_space<vmem>>, vector<1x16x128xf32>,
    return
  }
  func.func @transform_0(%arg0: i32) -> (i32, i32, i32) {
    %c0_i32 = arith.constant 0 : i32
    %c0_i32_0 = arith.constant 0 : i32
    %c0_i32_1 = arith.constant 0 : i32
    return %arg0, %c0_i32, %c0_i32_0 : i32, i32, i32
  }
  func.func @transform_1(%arg0: i32) -> (i32, i32, i32) {
    %c0_i32 = arith.constant 0 : i32
    %c0_i32_0 = arith.constant 0 : i32
    %c0_i32_1 = arith.constant 0 : i32
    %c0_i32_2 = arith.constant 0 : i32
    return %c0_i32, %c0_i32_0, %c0_i32_1 : i32, i32, i32
  }
  func.func @transform_2(%arg0: i32) -> (i32, i32) {
    %c0_i32 = arith.constant 0 : i32
    %c0_i32_0 = arith.constant 0 : i32
    %c0_i32_1 = arith.constant 0 : i32
    return %c0_i32, %c0_i32_0 : i32, i32
  }
  func.func @transform_3(%arg0: i32) -> (i32, i32, i32) {
    %c0_i32 = arith.constant 0 : i32
    %c0_i32_0 = arith.constant 0 : i32
    %c0_i32_1 = arith.constant 0 : i32
    return %arg0, %c0_i32, %c0_i32_0 : i32, i32, i32
  }
}

</mosaic_0001>

<llo_original>
// kernel: tpu_custom_call.1
$region0: #{tpu_custom_call.1}
  #allocation0 [shape = 'u32[]', space=smem, size = 0x4, offset = 0x4, fixed_abs, tag = 'smem constant byte address 0x4 - core index']
  #allocation1 [shape = 'u32[144,128]{1,0:T(1,128)}', space=vmem, size = 0x12000, scoped, tag = 'internal scratch']
  #allocation2 [shape = 'f32[18,64]{1,0:T(8,128)}', space=vmem, size = 0x3000, scoped, tag = 'scratch operand']
  %s0 = inlined_call_operand.hbm [shape: f32[2,16,64], index: 0, kind: input, shape index: {}]
  %s1 = inlined_call_operand.hbm [shape: f32[3,64,128], index: 1, kind: input, shape index: {}]
  %s2 = inlined_call_operand.vmem [shape: f32[1,128], index: 2, kind: input, shape index: {}]
  %s3 = inlined_call_operand.hbm [shape: f32[2,16,128], index: 3, kind: output, shape index: {}]
  %s4 = sld [smem:[#allocation0]]
  $region53: #{tpu_custom_call.1} parent=0
    _
  %s6 = ssub.s32 1, %s4
  %s7 = scalar_select 0, %s6, %s4
  $region1: #{tpu_custom_call.1} parent=0
    #allocation3 [shape = 'u8[16384]{0}', space=vmem, size = 0x4000, scoped, tag = 'input window, operand 0']
    #allocation4 [shape = 's32[2]{0}', space=sflag, size = 0x8, scoped, tag = 'scoped memory for tpu_custom_call.1']
    #allocation5 [shape = 's32[2]{0}', space=sflag, size = 0x8, scoped, tag = 'scoped memory for tpu_custom_call.1']
    #allocation6 [shape = 'u8[98304]{0}', space=vmem, size = 0x18000, scoped, tag = 'input window, operand 1, single buffered']
    #allocation7 [shape = 's32[1]{0}', space=sflag, size = 0x4, scoped, tag = 'scoped memory for tpu_custom_call.1']
    #allocation8 [shape = 'u8[16384]{0}', space=vmem, size = 0x4000, scoped, tag = 'output window, operand 0']
    %8 = vsyncpa [#allocation4], 0
    %s9 = scalar_lea.sflag [#allocation4], 1
    %10 = vsyncpa %s9, 0
    %11 = vsyncpa [#allocation7], 0
    %12 = vsyncpa [#allocation5], 0
    %s13 = scalar_lea.sflag [#allocation5], 1
    %14 = vsyncpa %s13, 0
    loop: start=0, step=1, limit=4
    $region2: #{tpu_custom_call.1} parent=1 // loop_pre_header
      _
    $region3: #{tpu_custom_call.1} parent=1 // loop_header
      %s16 = sphi 0, %s20
      %p17 = scmp.ge.s32.totalorder %s16, 4
      %s26 = sphi 0, %s28
      %s29 = sphi 0, %s26
      %s30 = sphi 0, %s29
      %s46 = sphi 0, %s30
      %s50 = sphi 0, %s50
      %s52 = sphi 0, %s50
      %s53 = sphi 0, %s52
      %s67 = sphi 0, %s53
      %s71 = sphi 0, %s71
      %s73 = sphi 0, %s71
      %s74 = sphi 0, %s73
      %s88 = sphi 0, %s74
      %s94 = sphi 0, %s96
      %s97 = sphi 0, %s94
      %s98 = sphi 0, %s97
      %s114 = sphi 0, %s98
    $region4: #{tpu_custom_call.1} parent=1 // loop_header_branch
      %19 = sbr.rel (%p17) target = $region8
    $region5: #{tpu_custom_call.1} parent=1 // loop_body
      %s21 = ssub.s32 %s16, 1
      %s22 = ssub.s32 %s16, 2
      %s23 = sadd.s32 %s16, 1
      %s24 = ssub.s32 %s16, %s23
      %p25 = scmp.eq.s32.totalorder %s24, 0
      %s27 = sadd.s32 %s26, 1
      %s28 = scalar_select %p25, %s26, %s27
      %p31 = pneg %p25
      %p32 = scmp.eq.s32.totalorder %s16, 1
      %p33 = por %p31, %p32
      %p34 = scmp.ne.s32.totalorder %s26, %s29
      %p35 = scmp.eq.s32.totalorder %s16, 0
      %p36 = por %p34, %p35
      %p37 = scmp.ne.s32.totalorder %s26, %s29
      %p38 = scmp.eq.s32.totalorder %s21, 1
      %p39 = por %p37, %p38
      %p40 = scmp.ne.s32.totalorder %s29, %s30
      %p41 = scmp.eq.s32.totalorder %s21, 0
      %p42 = por %p40, %p41
      %p43 = scmp.ne.s32.totalorder %s29, %s30
      %p44 = scmp.eq.s32.totalorder %s22, 1
      %p45 = por %p43, %p44
      %p47 = scmp.ne.s32.totalorder %s30, %s46
      %p48 = scmp.eq.s32.totalorder %s22, 0
      %p49 = por %p47, %p48
      %s51 = sadd.s32 %s50, 1
      %p54 = scmp.eq.s32.totalorder %s16, 1
      %p55 = scmp.ne.s32.totalorder %s50, %s52
      %p56 = scmp.eq.s32.totalorder %s16, 0
      %p57 = por %p55, %p56
      %p58 = scmp.ne.s32.totalorder %s50, %s52
      %p59 = scmp.eq.s32.totalorder %s21, 1
      %p60 = por %p58, %p59
      %p61 = scmp.ne.s32.totalorder %s52, %s53
      %p62 = scmp.eq.s32.totalorder %s21, 0
      %p63 = por %p61, %p62
      %p64 = scmp.ne.s32.totalorder %s52, %s53
      %p65 = scmp.eq.s32.totalorder %s22, 1
      %p66 = por %p64, %p65
      %p68 = scmp.ne.s32.totalorder %s53, %s67
      %p69 = scmp.eq.s32.totalorder %s22, 0
      %p70 = por %p68, %p69
      %s72 = sadd.s32 %s71, 1
      %p75 = scmp.eq.s32.totalorder %s16, 1
      %p76 = scmp.ne.s32.totalorder %s71, %s73
      %p77 = scmp.eq.s32.totalorder %s16, 0
      %p78 = por %p76, %p77
      %p79 = scmp.ne.s32.totalorder %s71, %s73
      %p80 = scmp.eq.s32.totalorder %s21, 1
      %p81 = por %p79, %p80
      %p82 = scmp.ne.s32.totalorder %s73, %s74
      %p83 = scmp.eq.s32.totalorder %s21, 0
      %p84 = por %p82, %p83
      %p85 = scmp.ne.s32.totalorder %s73, %s74
      %p86 = scmp.eq.s32.totalorder %s22, 1
      %p87 = por %p85, %p86
      %p89 = scmp.ne.s32.totalorder %s74, %s88
      %p90 = scmp.eq.s32.totalorder %s22, 0
      %p91 = por %p89, %p90
      %s92 = ssub.s32 %s16, %s23
      %p93 = scmp.eq.s32.totalorder %s92, 0
      %s95 = sadd.s32 %s94, 1
      %s96 = scalar_select %p93, %s94, %s95
      %p99 = pneg %p93
      %p100 = scmp.eq.s32.totalorder %s16, 1
      %p101 = por %p99, %p100
      %p102 = scmp.ne.s32.totalorder %s94, %s97
      %p103 = scmp.eq.s32.totalorder %s16, 0
      %p104 = por %p102, %p103
      %p105 = scmp.ne.s32.totalorder %s94, %s97
      %p106 = scmp.eq.s32.totalorder %s21, 1
      %p107 = por %p105, %p106
      %p108 = scmp.ne.s32.totalorder %s97, %s98
      %p109 = scmp.eq.s32.totalorder %s21, 0
      %p110 = por %p108, %p109
      %p111 = scmp.ne.s32.totalorder %s97, %s98
      %p112 = scmp.eq.s32.totalorder %s22, 1
      %p113 = por %p111, %p112
      %p115 = scmp.ne.s32.totalorder %s98, %s114
      %p116 = scmp.eq.s32.totalorder %s22, 0
      %p117 = por %p115, %p116
      %p118 = scmp.le.s32.totalorder 1, %s16
      %p119 = scmp.lt.s32.totalorder %s16, 3
      %p120 = pnand %p118, %p119
      %p121 = pneg %p120
      // Predicated region
      $region9: #{tpu_custom_call.1} parent=5 // pred_check
        _
      $region10: #{tpu_custom_call.1} parent=5 // pred_check_branch
        %123 = sbr.rel (%p120) target = $region12
      $region11: #{tpu_custom_call.1} parent=5 // pred_region
        %s124 = ssub.s32 %s16, 1
        // Predicated region
        $region13: #{tpu_custom_call.1} parent=11 // pred_check
          %p125 = pneg %p63
        $region14: #{tpu_custom_call.1} parent=11 // pred_check_branch
          %127 = sbr.rel (%p125) target = $region16
        $region15: #{tpu_custom_call.1} parent=11 // pred_region
          %s129 = ssub.s32 3072, 3072
          %130 = vsyncadd [#allocation7], %s129
          %s131 = sshll.u32 [#allocation6], 4
          %s132 = int_to_ptr.vmem [resolvable:$true] %s131
          %137 = dma.hbm_to_vmem [thread:$0]  %s1, 3072, %s132, [#allocation7], 128, 128, 8
        $region16: #{tpu_custom_call.1} parent=11 // pred_fallthru
          _
        // Predicated region
        $region17: #{tpu_custom_call.1} parent=11 // pred_check
          %p138 = pneg %p84
        $region18: #{tpu_custom_call.1} parent=11 // pred_check_branch
          %140 = sbr.rel (%p138) target = $region20
        $region19: #{tpu_custom_call.1} parent=11 // pred_region
          _
        $region20: #{tpu_custom_call.1} parent=11 // pred_fallthru
          _
      $region12: #{tpu_custom_call.1} parent=5 // pred_fallthru
        _
      %p141 = scmp.lt.s32.totalorder %s16, 2
      // Predicated region
      $region21: #{tpu_custom_call.1} parent=5 // pred_check
        %p142 = pneg %p141
      $region22: #{tpu_custom_call.1} parent=5 // pred_check_branch
        %144 = sbr.rel (%p142) target = $region24
      $region23: #{tpu_custom_call.1} parent=5 // pred_region
        // Predicated region
        $region25: #{tpu_custom_call.1} parent=23 // pred_check
          %p145 = pneg %p36
        $region26: #{tpu_custom_call.1} parent=23 // pred_check_branch
          %147 = sbr.rel (%p145) target = $region28
        $region27: #{tpu_custom_call.1} parent=23 // pred_region
          %s148 = sand.u32 %s26, 1
          %s149 = scalar_lea.sflag [#allocation4], %s148
          %s150 = sand.u32 %s26, 1
          %s151 = smul.addr %s150, 16
          %s152 = scalar_lea.vmem [#allocation3], %s151
          %s154 = ssub.s32 256, 256
          %155 = vsyncadd %s149, %s154
          %s156 = smul.addr %s16, 2
          %s157 = smul.addr %s156, 128
          %s158 = scalar_lea.hbm %s0, %s157
          %s159 = sshll.u32 %s152, 4
          %s160 = int_to_ptr.vmem [resolvable:$true] %s159
          %165 = dma.hbm_to_vmem [thread:$0]  %s158, 256, %s160, %s149, 128, 128, 8
        $region28: #{tpu_custom_call.1} parent=23 // pred_fallthru
          _
      $region24: #{tpu_custom_call.1} parent=5 // pred_fallthru
        _
      %p166 = scmp.le.s32.totalorder 1, %s16
      %p167 = scmp.lt.s32.totalorder %s16, 3
      %p168 = pnand %p166, %p167
      %p169 = pneg %p168
      // Predicated region
      $region29: #{tpu_custom_call.1} parent=5 // pred_check
        _
      $region30: #{tpu_custom_call.1} parent=5 // pred_check_branch
        %171 = sbr.rel (%p168) target = $region32
      $region31: #{tpu_custom_call.1} parent=5 // pred_region
        %s172 = ssub.s32 %s16, 1
        %s173 = sand.u32 %s29, 1
        %s174 = scalar_lea.sflag [#allocation4], %s173
        %s175 = sand.u32 %s29, 1
        %s176 = smul.addr %s175, 16
        %s177 = scalar_lea.vmem [#allocation3], %s176
        // Predicated region
        $region33: #{tpu_custom_call.1} parent=31 // pred_check
          %p178 = pneg %p42
        $region34: #{tpu_custom_call.1} parent=31 // pred_check_branch
          %180 = sbr.rel (%p178) target = $region36
        $region35: #{tpu_custom_call.1} parent=31 // pred_region
          %181 = dma.done %s174, 256
        $region36: #{tpu_custom_call.1} parent=31 // pred_fallthru
          _
        // Predicated region
        $region37: #{tpu_custom_call.1} parent=31 // pred_check
          %p182 = pneg %p63
        $region38: #{tpu_custom_call.1} parent=31 // pred_check_branch
          %184 = sbr.rel (%p182) target = $region40
        $region39: #{tpu_custom_call.1} parent=31 // pred_region
          %185 = dma.done [#allocation7], 3072
        $region40: #{tpu_custom_call.1} parent=31 // pred_fallthru
          _
        %s186 = sand.u32 %s29, 1
        %s187 = scalar_lea.sflag [#allocation4], %s186
        %s188 = sand.u32 %s29, 1
        %s189 = smul.addr %s188, 16
        %s190 = scalar_lea.vmem [#allocation3], %s189
        %p191 = pneg %p42
        %p192 = pneg %p39
        %p193 = pneg %p63
        %p194 = pneg %p60
        %p195 = pneg %p84
        %p196 = pneg %p81
        %p197 = pneg %p110
        %p198 = pneg %p107
        %s199 = sand.u32 %s97, 1
        %s200 = scalar_lea.sflag [#allocation5], %s199
        %s201 = sand.u32 %s97, 1
        %s202 = smul.addr %s201, 16
        %s203 = scalar_lea.vmem [#allocation8], %s202
        %vm204 = vcmask 523264
        %205 = vst.msk [vmem:[#allocation2] sm:$0xff] %vm204, 0.0
        %206 = vst.msk [vmem:[#allocation2 + $0x8] sm:$0xff] %vm204, 0.0
        %vm207 = vcmask 517120
        %208 = vst.msk [vmem:[#allocation2 + $0x10] sm:$0x3] %vm207, 0.0
        %v209 = vld [vmem:[%s177] sm:$0xff]
        %v210 = vld [vmem:[%s177 + $0x8] sm:$0xff]
        %211 = vst.msk [vmem:[#allocation2 + $0x1] sm:$0xff] %vm204, %v209
        %212 = vst.msk [vmem:[#allocation2 + $0x9] sm:$0xff] %vm204, %v210
        %v213 = vld [vmem:[#allocation2] sm:$0xff]
        %v214 = vld [vmem:[#allocation2 + $0x8] sm:$0xff]
        %v215 = vld [vmem:[#allocation6] sm:$0xff]
        %v216 = vld [vmem:[#allocation6 + $0x8] sm:$0xff]
        %v217 = vld [vmem:[#allocation6 + $0x10] sm:$0xff]
        %v218 = vld [vmem:[#allocation6 + $0x18] sm:$0xff]
        %v219 = vld [vmem:[#allocation6 + $0x20] sm:$0xff]
        %v220 = vld [vmem:[#allocation6 + $0x28] sm:$0xff]
        %v221 = vld [vmem:[#allocation6 + $0x30] sm:$0xff]
        %v222 = vld [vmem:[#allocation6 + $0x38] sm:$0xff]
        %v223 = vld [vmem:[#allocation2 + $0x1] sm:$0xff]
        %v224 = vld [vmem:[#allocation2 + $0x9] sm:$0xff]
        %s225 = scalar_lea.vmem [#allocation6], 64
        %v226 = vld [vmem:[%s225] sm:$0xff]
        %v227 = vld [vmem:[%s225 + $0x8] sm:$0xff]
        %v228 = vld [vmem:[%s225 + $0x10] sm:$0xff]
        %v229 = vld [vmem:[%s225 + $0x18] sm:$0xff]
        %v230 = vld [vmem:[%s225 + $0x20] sm:$0xff]
        %v231 = vld [vmem:[%s225 + $0x28] sm:$0xff]
        %v232 = vld [vmem:[%s225 + $0x30] sm:$0xff]
        %v233 = vld [vmem:[%s225 + $0x38] sm:$0xff]
        %v235 = vsel %vm204, %v223, 0
        %v238 = vsel %vm204, %v224, 0
        %240 = vmatprep.subr.mxu0 0.0
        %241 = vmatpush1.msra.mxu0 0.0
        %242 = vmatprep.subr.mxu0 0.0
        %243 = vmatpush1.msra.mxu0 0.0
        %244 = vmatprep.subr.mxu0 0.0
        %245 = vmatpush1.msra.mxu0 0.0
        %246 = vmatprep.subr.mxu0 0.0
        %247 = vmatpush1.msra.mxu0 0.0
        %248 = vmatprep.subr.mxu0 0.0
        %249 = vmatpush1.msra.mxu0 0.0
        %250 = vmatprep.subr.mxu0 0.0
        %251 = vmatpush1.msra.mxu0 0.0
        %252 = vmatprep.subr.mxu0 0.0
        %253 = vmatpush1.msra.mxu0 0.0
        %254 = vmatprep.subr.mxu0 0.0
        %255 = vmatpush1.msra.mxu0 0.0
        %256 = vmatprep.subr.mxu0 0.0
        %257 = vmatpush1.msra.mxu0 %v233
        %258 = vmatprep.subr.mxu0 0.0
        %259 = vmatpush1.msra.mxu0 %v232
        %260 = vmatprep.subr.mxu0 0.0
        %261 = vmatpush1.msra.mxu0 %v231
        %262 = vmatprep.subr.mxu0 0.0
        %263 = vmatpush1.msra.mxu0 %v230
        %264 = vmatprep.subr.mxu0 0.0
        %265 = vmatpush1.msra.mxu0 %v229
        %266 = vmatprep.subr.mxu0 0.0
        %267 = vmatpush1.msra.mxu0 %v228
        %268 = vmatprep.subr.mxu0 0.0
        %269 = vmatpush1.msra.mxu0 %v227
        %270 = vmatprep.subr.mxu0 0.0
        %271 = vmatpush1.msra.mxu0 %v226
        %272 = vmatprep.subr.mxu0 0.0
        %273 = vmatpush2.msra.mxu0 0.0
        %274 = vmatprep.subr.mxu0 0.0
        %275 = vmatpush2.msra.mxu0 0.0
        %276 = vmatprep.subr.mxu0 0.0
        %277 = vmatpush2.msra.mxu0 0.0
        %278 = vmatprep.subr.mxu0 0.0
        %279 = vmatpush2.msra.mxu0 0.0
        %280 = vmatprep.subr.mxu0 0.0
        %281 = vmatpush2.msra.mxu0 0.0
        %282 = vmatprep.subr.mxu0 0.0
        %283 = vmatpush2.msra.mxu0 0.0
        %284 = vmatprep.subr.mxu0 0.0
        %285 = vmatpush2.msra.mxu0 0.0
        %286 = vmatprep.subr.mxu0 0.0
        %287 = vmatpush2.msra.mxu0 0.0
        %288 = vmatprep.subr.mxu0 0.0
        %289 = vmatpush2.msra.mxu0 0.0
        %290 = vmatprep.subr.mxu0 0.0
        %291 = vmatpush2.msra.mxu0 0.0
        %292 = vmatprep.subr.mxu0 0.0
        %293 = vmatpush2.msra.mxu0 0.0
        %294 = vmatprep.subr.mxu0 0.0
        %295 = vmatpush2.msra.mxu0 0.0
        %296 = vmatprep.subr.mxu0 0.0
        %297 = vmatpush2.msra.mxu0 0.0
        %298 = vmatprep.subr.mxu0 0.0
        %299 = vmatpush2.msra.mxu0 0.0
        %300 = vmatprep.subr.mxu0 0.0
        %301 = vmatpush2.msra.mxu0 0.0
        %302 = vmatprep.subr.mxu0 0.0
        %303 = vmatpush2.msra.mxu0 0.0
        %304 = vmatprep.mubr.f32.mxu0 0.0
        %305 = vmatmul.mubr.f32.gmra.mxu0 %v235
        %v306 = vpop.f32.mrf.mxu0
        %v307 = vadd.f32 0.0, %v306
        %v308 = vpop.f32.mrf.mxu0
        %309 = vmatprep.mubr.f32.mxu0 0.0
        %310 = vmatmul.mubr.f32.gmra.mxu0 %v238
        %v311 = vpop.f32.mrf.mxu0
        %v312 = vadd.f32 0.0, %v311
        %v313 = vpop.f32.mrf.mxu0
        %314 = vdwg.mxu0
        %v316 = vsel %vm204, %v213, 0
        %v319 = vsel %vm204, %v214, 0
        %321 = vmatprep.subr.mxu0 0.0
        %322 = vmatpush1.msra.mxu0 0.0
        %323 = vmatprep.subr.mxu0 0.0
        %324 = vmatpush1.msra.mxu0 0.0
        %325 = vmatprep.subr.mxu0 0.0
        %326 = vmatpush1.msra.mxu0 0.0
        %327 = vmatprep.subr.mxu0 0.0
        %328 = vmatpush1.msra.mxu0 0.0
        %329 = vmatprep.subr.mxu0 0.0
        %330 = vmatpush1.msra.mxu0 0.0
        %331 = vmatprep.subr.mxu0 0.0
        %332 = vmatpush1.msra.mxu0 0.0
        %333 = vmatprep.subr.mxu0 0.0
        %334 = vmatpush1.msra.mxu0 0.0
        %335 = vmatprep.subr.mxu0 0.0
        %336 = vmatpush1.msra.mxu0 0.0
        %337 = vmatprep.subr.mxu0 0.0
        %338 = vmatpush1.msra.mxu0 %v222
        %339 = vmatprep.subr.mxu0 0.0
        %340 = vmatpush1.msra.mxu0 %v221
        %341 = vmatprep.subr.mxu0 0.0
        %342 = vmatpush1.msra.mxu0 %v220
        %343 = vmatprep.subr.mxu0 0.0
        %344 = vmatpush1.msra.mxu0 %v219
        %345 = vmatprep.subr.mxu0 0.0
        %346 = vmatpush1.msra.mxu0 %v218
        %347 = vmatprep.subr.mxu0 0.0
        %348 = vmatpush1.msra.mxu0 %v217
        %349 = vmatprep.subr.mxu0 0.0
        %350 = vmatpush1.msra.mxu0 %v216
        %351 = vmatprep.subr.mxu0 0.0
        %352 = vmatpush1.msra.mxu0 %v215
        %353 = vmatprep.subr.mxu0 0.0
        %354 = vmatpush2.msra.mxu0 0.0
        %355 = vmatprep.subr.mxu0 0.0
        %356 = vmatpush2.msra.mxu0 0.0
        %357 = vmatprep.subr.mxu0 0.0
        %358 = vmatpush2.msra.mxu0 0.0
        %359 = vmatprep.subr.mxu0 0.0
        %360 = vmatpush2.msra.mxu0 0.0
        %361 = vmatprep.subr.mxu0 0.0
        %362 = vmatpush2.msra.mxu0 0.0
        %363 = vmatprep.subr.mxu0 0.0
        %364 = vmatpush2.msra.mxu0 0.0
        %365 = vmatprep.subr.mxu0 0.0
        %366 = vmatpush2.msra.mxu0 0.0
        %367 = vmatprep.subr.mxu0 0.0
        %368 = vmatpush2.msra.mxu0 0.0
        %369 = vmatprep.subr.mxu0 0.0
        %370 = vmatpush2.msra.mxu0 0.0
        %371 = vmatprep.subr.mxu0 0.0
        %372 = vmatpush2.msra.mxu0 0.0
        %373 = vmatprep.subr.mxu0 0.0
        %374 = vmatpush2.msra.mxu0 0.0
        %375 = vmatprep.subr.mxu0 0.0
        %376 = vmatpush2.msra.mxu0 0.0
        %377 = vmatprep.subr.mxu0 0.0
        %378 = vmatpush2.msra.mxu0 0.0
        %379 = vmatprep.subr.mxu0 0.0
        %380 = vmatpush2.msra.mxu0 0.0
        %381 = vmatprep.subr.mxu0 0.0
        %382 = vmatpush2.msra.mxu0 0.0
        %383 = vmatprep.subr.mxu0 0.0
        %384 = vmatpush2.msra.mxu0 0.0
        %385 = vmatprep.mubr.f32.mxu0 0.0
        %386 = vmatmul.mubr.f32.gmra.mxu0 %v316
        %v387 = vpop.f32.mrf.mxu0
        %v388 = vadd.f32 %v307, %v387
        %v389 = vpop.f32.mrf.mxu0
        %390 = vmatprep.mubr.f32.mxu0 0.0
        %391 = vmatmul.mubr.f32.gmra.mxu0 %v319
        %v392 = vpop.f32.mrf.mxu0
        %v393 = vadd.f32 %v312, %v392
        %v394 = vpop.f32.mrf.mxu0
        %395 = vdwg.mxu0
        %v396 = vld [vmem:[#allocation2 + $0x2] sm:$0xff]
        %v397 = vld [vmem:[#allocation2 + $0xa] sm:$0xff]
        %s398 = scalar_lea.vmem [#allocation6], 128
        %v399 = vld [vmem:[%s398] sm:$0xff]
        %v400 = vld [vmem:[%s398 + $0x8] sm:$0xff]
        %v401 = vld [vmem:[%s398 + $0x10] sm:$0xff]
        %v402 = vld [vmem:[%s398 + $0x18] sm:$0xff]
        %v403 = vld [vmem:[%s398 + $0x20] sm:$0xff]
        %v404 = vld [vmem:[%s398 + $0x28] sm:$0xff]
        %v405 = vld [vmem:[%s398 + $0x30] sm:$0xff]
        %v406 = vld [vmem:[%s398 + $0x38] sm:$0xff]
        %v408 = vsel %vm204, %v396, 0
        %v411 = vsel %vm204, %v397, 0
        %413 = vmatprep.subr.mxu0 0.0
        %414 = vmatpush1.msra.mxu0 0.0
        %415 = vmatprep.subr.mxu0 0.0
        %416 = vmatpush1.msra.mxu0 0.0
        %417 = vmatprep.subr.mxu0 0.0
        %418 = vmatpush1.msra.mxu0 0.0
        %419 = vmatprep.subr.mxu0 0.0
        %420 = vmatpush1.msra.mxu0 0.0
        %421 = vmatprep.subr.mxu0 0.0
        %422 = vmatpush1.msra.mxu0 0.0
        %423 = vmatprep.subr.mxu0 0.0
        %424 = vmatpush1.msra.mxu0 0.0
        %425 = vmatprep.subr.mxu0 0.0
        %426 = vmatpush1.msra.mxu0 0.0
        %427 = vmatprep.subr.mxu0 0.0
        %428 = vmatpush1.msra.mxu0 0.0
        %429 = vmatprep.subr.mxu0 0.0
        %430 = vmatpush1.msra.mxu0 %v406
        %431 = vmatprep.subr.mxu0 0.0
        %432 = vmatpush1.msra.mxu0 %v405
        %433 = vmatprep.subr.mxu0 0.0
        %434 = vmatpush1.msra.mxu0 %v404
        %435 = vmatprep.subr.mxu0 0.0
        %436 = vmatpush1.msra.mxu0 %v403
        %437 = vmatprep.subr.mxu0 0.0
        %438 = vmatpush1.msra.mxu0 %v402
        %439 = vmatprep.subr.mxu0 0.0
        %440 = vmatpush1.msra.mxu0 %v401
        %441 = vmatprep.subr.mxu0 0.0
        %442 = vmatpush1.msra.mxu0 %v400
        %443 = vmatprep.subr.mxu0 0.0
        %444 = vmatpush1.msra.mxu0 %v399
        %445 = vmatprep.subr.mxu0 0.0
        %446 = vmatpush2.msra.mxu0 0.0
        %447 = vmatprep.subr.mxu0 0.0
        %448 = vmatpush2.msra.mxu0 0.0
        %449 = vmatprep.subr.mxu0 0.0
        %450 = vmatpush2.msra.mxu0 0.0
        %451 = vmatprep.subr.mxu0 0.0
        %452 = vmatpush2.msra.mxu0 0.0
        %453 = vmatprep.subr.mxu0 0.0
        %454 = vmatpush2.msra.mxu0 0.0
        %455 = vmatprep.subr.mxu0 0.0
        %456 = vmatpush2.msra.mxu0 0.0
        %457 = vmatprep.subr.mxu0 0.0
        %458 = vmatpush2.msra.mxu0 0.0
        %459 = vmatprep.subr.mxu0 0.0
        %460 = vmatpush2.msra.mxu0 0.0
        %461 = vmatprep.subr.mxu0 0.0
        %462 = vmatpush2.msra.mxu0 0.0
        %463 = vmatprep.subr.mxu0 0.0
        %464 = vmatpush2.msra.mxu0 0.0
        %465 = vmatprep.subr.mxu0 0.0
        %466 = vmatpush2.msra.mxu0 0.0
        %467 = vmatprep.subr.mxu0 0.0
        %468 = vmatpush2.msra.mxu0 0.0
        %469 = vmatprep.subr.mxu0 0.0
        %470 = vmatpush2.msra.mxu0 0.0
        %471 = vmatprep.subr.mxu0 0.0
        %472 = vmatpush2.msra.mxu0 0.0
        %473 = vmatprep.subr.mxu0 0.0
        %474 = vmatpush2.msra.mxu0 0.0
        %475 = vmatprep.subr.mxu0 0.0
        %476 = vmatpush2.msra.mxu0 0.0
        %477 = vmatprep.mubr.f32.mxu0 0.0
        %478 = vmatmul.mubr.f32.gmra.mxu0 %v408
        %v479 = vpop.f32.mrf.mxu0
        %v480 = vadd.f32 0.0, %v479
        %v481 = vpop.f32.mrf.mxu0
        %482 = vmatprep.mubr.f32.mxu0 0.0
        %483 = vmatmul.mubr.f32.gmra.mxu0 %v411
        %v484 = vpop.f32.mrf.mxu0
        %v485 = vadd.f32 0.0, %v484
        %v486 = vpop.f32.mrf.mxu0
        %487 = vdwg.mxu0
        %v488 = vadd.f32 %v388, %v480
        %v489 = vadd.f32 %v393, %v485
        %v490 = vld [vmem:[%s2] sm:$0x1]
        %v492 = vlaneseq
        %v493 = vshrl.u32 %v492, 7
        %v494 = vsub.s32 0, %v493
        %v495 = vrot.slane %v490, %v494
        %v497 = vadd.f32 %v488, %v495
        %v498 = vadd.f32 %v489, %v495
        %v499 = vmax.f32 %v497, 0.0
        %v500 = vmax.f32 %v498, 0.0
        %501 = vst [vmem:[%s203] sm:$0xff] %v499
        %502 = vst [vmem:[%s203 + $0x8] sm:$0xff] %v500
        %s503 = sand.u32 %s97, 1
        %s504 = scalar_lea.sflag [#allocation5], %s503
        %s505 = sand.u32 %s97, 1
        %s506 = smul.addr %s505, 16
        %s507 = scalar_lea.vmem [#allocation8], %s506
        // Predicated region
        $region41: #{tpu_custom_call.1} parent=31 // pred_check
          %p508 = pneg %p107
        $region42: #{tpu_custom_call.1} parent=31 // pred_check_branch
          %510 = sbr.rel (%p508) target = $region44
        $region43: #{tpu_custom_call.1} parent=31 // pred_region
          %s512 = ssub.s32 256, 256
          %513 = vsyncadd %s504, %s512
          %s514 = smul.addr %s21, 2
          %s515 = smul.addr %s514, 128
          %s516 = scalar_lea.hbm %s3, %s515
          %s517 = sshll.u32 %s507, 4
          %s518 = int_to_ptr.vmem [resolvable:$true] %s517
          %523 = dma.vmem_to_hbm [thread:$0]  %s518, 256, %s516, %s504, 128, 128, 8
        $region44: #{tpu_custom_call.1} parent=31 // pred_fallthru
          _
      $region32: #{tpu_custom_call.1} parent=5 // pred_fallthru
        _
      %p524 = scmp.le.s32.totalorder 2, %s16
      // Predicated region
      $region45: #{tpu_custom_call.1} parent=5 // pred_check
        %p525 = pneg %p524
      $region46: #{tpu_custom_call.1} parent=5 // pred_check_branch
        %527 = sbr.rel (%p525) target = $region48
      $region47: #{tpu_custom_call.1} parent=5 // pred_region
        %s528 = ssub.s32 %s16, 2
        // Predicated region
        $region49: #{tpu_custom_call.1} parent=47 // pred_check
          %p529 = pneg %p113
        $region50: #{tpu_custom_call.1} parent=47 // pred_check_branch
          %531 = sbr.rel (%p529) target = $region52
        $region51: #{tpu_custom_call.1} parent=47 // pred_region
          %s532 = sand.u32 %s98, 1
          %s533 = scalar_lea.sflag [#allocation5], %s532
          %s534 = sand.u32 %s98, 1
          %s535 = smul.addr %s534, 16
          %s536 = scalar_lea.vmem [#allocation8], %s535
          %537 = dma.done %s533, 256
        $region52: #{tpu_custom_call.1} parent=47 // pred_fallthru
          _
      $region48: #{tpu_custom_call.1} parent=5 // pred_fallthru
        _
    $region6: #{tpu_custom_call.1} parent=1 // loop_footer
      %s20 = sadd.s32 1, %s16
    $region7: #{tpu_custom_call.1} parent=1 // loop_footer_branch
      %15 = sbr.rel target = $region3
    $region8: #{tpu_custom_call.1} parent=1 // loop_exit
      _
    %538 = vsyncpa [#allocation4], 1
    %s539 = scalar_lea.sflag [#allocation4], 1
    %540 = vsyncpa %s539, 1
    %541 = vsyncpa [#allocation7], 1
    %542 = vsyncpa [#allocation5], 1
    %s543 = scalar_lea.sflag [#allocation5], 1
    %544 = vsyncpa %s543, 1

</llo_original>
